<compile_context>
chip_gen: v5e
topology: v5e:2x2
jax: 0.10.0
libtpu: 0.0.40
codegen_flags: <defaults>
</compile_context>

<pallas_src>
import jax
import jax.numpy as jnp
from jax.experimental import pallas as pl
from jax.experimental.pallas import tpu as pltpu

IN_FEATURES = 10
HIDDEN = 5
OUT_FEATURES = 1
LANES = 128


def simplenet_kernel(w1_ref, b1_ref, w2_ref, b2_ref, x_ref, o_ref):
    """w1 (5,10), b1 (5,), w2 (1,5), b2 (1,) live in SMEM; x tile (10, rows, 128) in VMEM.

    Computes y = W2 @ relu(W1 @ x + b1) + b2 with the batch on sublanes/lanes,
    entirely as unrolled scalar-broadcast FMA VPU work (no MXU pass).
    """
    hidden, in_features = w1_ref.shape            # (5, 10) -- static
    x = x_ref[...]                                # (in_features, rows, 128) f32
    y = None
    for j in range(hidden):                       # 5 hidden units, fully unrolled
        h = b1_ref[j] + w1_ref[j, 0] * x[0]       # scalar (SMEM) x vreg broadcast-FMA
        for i in range(1, in_features):
            h = h + w1_ref[j, i] * x[i]
        h = jnp.maximum(h, 0.0)                   # ReLU
        contrib = w2_ref[0, j] * h                # fc2 as scaled accumulation
        y = contrib if y is None else y + contrib
    y = y + b2_ref[0]
    o_ref[...] = y.astype(o_ref.dtype)            # dense (rows, 128) store


def simplenet_forward(x, w1, b1, w2, b2, *, block_rows=16):
    """x: (B, 10) f32. Weights use the PyTorch nn.Linear layout:
       w1 = fc1.weight (5, 10), b1 = fc1.bias (5,), w2 = fc2.weight (1, 5), b2 = fc2.bias (1,).
       Returns (B, 1), identical math to relu(x @ W1.T + b1) @ W2.T + b2.
    """
    B, in_features = x.shape
    hidden = w1.shape[0]
    assert in_features == IN_FEATURES and hidden == HIDDEN
    assert w2.shape == (OUT_FEATURES, HIDDEN)

    # Lane-dense batch slab: batch index b -> (b // 128, b % 128).
    rows_needed = pl.cdiv(B, LANES)
    block_rows = max(8, min(block_rows, pl.cdiv(rows_needed, 8) * 8))  # multiple of 8 sublanes
    rows = pl.cdiv(rows_needed, block_rows) * block_rows
    b_pad = rows * LANES

    x_pad = jnp.pad(x, ((0, b_pad - B), (0, 0)))              # (B_pad, 10)
    x_slab = x_pad.T.reshape(in_features, rows, LANES)        # (10, rows, 128) lane-dense

    grid = (rows // block_rows,)

    flops = 2 * B * (IN_FEATURES * HIDDEN + HIDDEN * OUT_FEATURES)
    bytes_accessed = int(x.size + B * OUT_FEATURES + w1.size + b1.size + w2.size + b2.size) * 4

    y_slab = pl.pallas_call(
        simplenet_kernel,
        out_shape=jax.ShapeDtypeStruct((rows, LANES), x.dtype),
        grid=grid,
        in_specs=[
            pl.BlockSpec(memory_space=pltpu.MemorySpace.SMEM),   # w1 (5, 10)
            pl.BlockSpec(memory_space=pltpu.MemorySpace.SMEM),   # b1 (5,)
            pl.BlockSpec(memory_space=pltpu.MemorySpace.SMEM),   # w2 (1, 5)
            pl.BlockSpec(memory_space=pltpu.MemorySpace.SMEM),   # b2 (1,)
            pl.BlockSpec((in_features, block_rows, LANES), lambda g: (0, g, 0)),  # x tile
        ],
        out_specs=pl.BlockSpec((block_rows, LANES), lambda g: (g, 0)),
        compiler_params=pltpu.CompilerParams(
            dimension_semantics=("parallel",)),
        cost_estimate=pl.CostEstimate(
            flops=flops, transcendentals=0, bytes_accessed=bytes_accessed),
    )(w1, b1, w2, b2, x_slab)

    return y_slab.reshape(-1)[:B, None]                       # (B, 1)


def init_params(key):
    # Deterministic synthetic init, shapes from SimpleNet.__init__ (PyTorch layout).
    k1, k2, k3, k4 = jax.random.split(key, 4)
    w1 = jax.random.normal(k1, (HIDDEN, IN_FEATURES), dtype=jnp.float32) * 0.1   # fc1.weight
    b1 = jax.random.normal(k2, (HIDDEN,), dtype=jnp.float32) * 0.1               # fc1.bias
    w2 = jax.random.normal(k3, (OUT_FEATURES, HIDDEN), dtype=jnp.float32) * 0.1  # fc2.weight
    b2 = jax.random.normal(k4, (OUT_FEATURES,), dtype=jnp.float32) * 0.1         # fc2.bias
    return w1, b1, w2, b2


if __name__ == "__main__":
    key = jax.random.PRNGKey(0)
    pkey, xkey = jax.random.split(key)
    w1, b1, w2, b2 = init_params(pkey)

    # NOTE: at toy batch sizes the pallas_call overhead dominates (plain fused XLA would
    # win); the kernel layout is designed to be HBM-bandwidth-bound at large batch.
    batch = 8
    x = jax.random.normal(xkey, (batch, IN_FEATURES), dtype=jnp.float32)

    y = jax.block_until_ready(simplenet_forward(x, w1, b1, w2, b2))

    # Pure-JAX reference of the PyTorch forward: relu(x @ W1.T + b1) @ W2.T + b2
    y_ref = jnp.maximum(x @ w1.T + b1, 0.0) @ w2.T + b2
    assert y.shape == (batch, OUT_FEATURES)
    assert jnp.allclose(y, y_ref, atol=1e-5, rtol=1e-5)

    print("KERNEL_OK")
</pallas_src>

<mosaic_0001>
module attributes {stable_mosaic.version = 11 : i64} {
  func.func @simplenet_kernel(%arg0: i32, %arg1: memref<5x10xf32, #tpu.memory_space<smem>>, %arg2: memref<5xf32, #tpu.memory_space<smem>>, %arg3: memref<1x5xf32, #tpu.memory_space<smem>>, %arg4: memref<1xf32, #tpu.memory_space<smem>>, %arg5: memref<10x8x128xf32, #tpu.memory_space<vmem>>, %arg6: memref<8x128xf32, #tpu.memory_space<vmem>>) attributes {dimension_semantics = [#tpu.dimension_semantics<parallel>], iteration_bounds = array<i64: 1>, scalar_prefetch = 0 : i64, scratch_operands = 0 : i64, tpu.core_type = #tpu.core_type<tc>, window_params = [{transform_indices = @transform_0, window_bounds = array<i64: 5, 10>}, {transform_indices = @transform_1, window_bounds = array<i64: 5>}, {transform_indices = @transform_2, window_bounds = array<i64: 1, 5>}, {transform_indices = @transform_3, window_bounds = array<i64: 1>}, {transform_indices = @transform_4, window_bounds = array<i64: 10, 8, 128>}, {transform_indices = @transform_5, window_bounds = array<i64: 8, 128>}]} {
    %c0 = arith.constant 0 : index
    %c0_0 = arith.constant 0 : index
    %c0_1 = arith.constant 0 : index
    %0 = vector.load %arg5[%c0, %c0_0, %c0_1] : memref<10x8x128xf32, #tpu.memory_space<vmem>>, vector<10x8x128xf32>
    %c0_2 = arith.constant 0 : index
    %1 = memref.load %arg2[%c0_2] : memref<5xf32, #tpu.memory_space<smem>>
    %c0_3 = arith.constant 0 : index
    %c0_4 = arith.constant 0 : index
    %2 = memref.load %arg1[%c0_3, %c0_4] : memref<5x10xf32, #tpu.memory_space<smem>>
    %3 = vector.extract_strided_slice %0 {offsets = [0, 0, 0], sizes = [1, 8, 128], strides = [1, 1, 1]} : vector<10x8x128xf32> to vector<1x8x128xf32>
    %4 = vector.shape_cast %3 : vector<1x8x128xf32> to vector<8x128xf32>
    %5 = vector.broadcast %2 : f32 to vector<8x128xf32>
    %6 = arith.mulf %5, %4 : vector<8x128xf32>
    %7 = vector.broadcast %1 : f32 to vector<8x128xf32>
    %8 = arith.addf %7, %6 : vector<8x128xf32>
    %c0_5 = arith.constant 0 : index
    %c1 = arith.constant 1 : index
    %9 = memref.load %arg1[%c0_5, %c1] : memref<5x10xf32, #tpu.memory_space<smem>>
    %10 = vector.extract_strided_slice %0 {offsets = [1, 0, 0], sizes = [1, 8, 128], strides = [1, 1, 1]} : vector<10x8x128xf32> to vector<1x8x128xf32>
    %11 = vector.shape_cast %10 : vector<1x8x128xf32> to vector<8x128xf32>
    %12 = vector.broadcast %9 : f32 to vector<8x128xf32>
    %13 = arith.mulf %12, %11 : vector<8x128xf32>
    %14 = arith.addf %8, %13 : vector<8x128xf32>
    %c0_6 = arith.constant 0 : index
    %c2 = arith.constant 2 : index
    %15 = memref.load %arg1[%c0_6, %c2] : memref<5x10xf32, #tpu.memory_space<smem>>
    %16 = vector.extract_strided_slice %0 {offsets = [2, 0, 0], sizes = [1, 8, 128], strides = [1, 1, 1]} : vector<10x8x128xf32> to vector<1x8x128xf32>
    %17 = vector.shape_cast %16 : vector<1x8x128xf32> to vector<8x128xf32>
    %18 = vector.broadcast %15 : f32 to vector<8x128xf32>
    %19 = arith.mulf %18, %17 : vector<8x128xf32>
    %20 = arith.addf %14, %19 : vector<8x128xf32>
    %c0_7 = arith.constant 0 : index
    %c3 = arith.constant 3 : index
    %21 = memref.load %arg1[%c0_7, %c3] : memref<5x10xf32, #tpu.memory_space<smem>>
    %22 = vector.extract_strided_slice %0 {offsets = [3, 0, 0], sizes = [1, 8, 128], strides = [1, 1, 1]} : vector<10x8x128xf32> to vector<1x8x128xf32>
    %23 = vector.shape_cast %22 : vector<1x8x128xf32> to vector<8x128xf32>
    %24 = vector.broadcast %21 : f32 to vector<8x128xf32>
    %25 = arith.mulf %24, %23 : vector<8x128xf32>
    %26 = arith.addf %20, %25 : vector<8x128xf32>
    %c0_8 = arith.constant 0 : index
    %c4 = arith.constant 4 : index
    %27 = memref.load %arg1[%c0_8, %c4] : memref<5x10xf32, #tpu.memory_space<smem>>
    %28 = vector.extract_strided_slice %0 {offsets = [4, 0, 0], sizes = [1, 8, 128], strides = [1, 1, 1]} : vector<10x8x128xf32> to vector<1x8x128xf32>
    %29 = vector.shape_cast %28 : vector<1x8x128xf32> to vector<8x128xf32>
    %30 = vector.broadcast %27 : f32 to vector<8x128xf32>
    %31 = arith.mulf %30, %29 : vector<8x128xf32>
    %32 = arith.addf %26, %31 : vector<8x128xf32>
    %c0_9 = arith.constant 0 : index
    %c5 = arith.constant 5 : index
    %33 = memref.load %arg1[%c0_9, %c5] : memref<5x10xf32, #tpu.memory_space<smem>>
    %34 = vector.extract_strided_slice %0 {offsets = [5, 0, 0], sizes = [1, 8, 128], strides = [1, 1, 1]} : vector<10x8x128xf32> to vector<1x8x128xf32>
    %35 = vector.shape_cast %34 : vector<1x8x128xf32> to vector<8x128xf32>
    %36 = vector.broadcast %33 : f32 to vector<8x128xf32>
    %37 = arith.mulf %36, %35 : vector<8x128xf32>
    %38 = arith.addf %32, %37 : vector<8x128xf32>
    %c0_10 = arith.constant 0 : index
    %c6 = arith.constant 6 : index
    %39 = memref.load %arg1[%c0_10, %c6] : memref<5x10xf32, #tpu.memory_space<smem>>
    %40 = vector.extract_strided_slice %0 {offsets = [6, 0, 0], sizes = [1, 8, 128], strides = [1, 1, 1]} : vector<10x8x128xf32> to vector<1x8x128xf32>
    %41 = vector.shape_cast %40 : vector<1x8x128xf32> to vector<8x128xf32>
    %42 = vector.broadcast %39 : f32 to vector<8x128xf32>
    %43 = arith.mulf %42, %41 : vector<8x128xf32>
    %44 = arith.addf %38, %43 : vector<8x128xf32>
    %c0_11 = arith.constant 0 : index
    %c7 = arith.constant 7 : index
    %45 = memref.load %arg1[%c0_11, %c7] : memref<5x10xf32, #tpu.memory_space<smem>>
    %46 = vector.extract_strided_slice %0 {offsets = [7, 0, 0], sizes = [1, 8, 128], strides = [1, 1, 1]} : vector<10x8x128xf32> to vector<1x8x128xf32>
    %47 = vector.shape_cast %46 : vector<1x8x128xf32> to vector<8x128xf32>
    %48 = vector.broadcast %45 : f32 to vector<8x128xf32>
    %49 = arith.mulf %48, %47 : vector<8x128xf32>
    %50 = arith.addf %44, %49 : vector<8x128xf32>
    %c0_12 = arith.constant 0 : index
    %c8 = arith.constant 8 : index
    %51 = memref.load %arg1[%c0_12, %c8] : memref<5x10xf32, #tpu.memory_space<smem>>
    %52 = vector.extract_strided_slice %0 {offsets = [8, 0, 0], sizes = [1, 8, 128], strides = [1, 1, 1]} : vector<10x8x128xf32> to vector<1x8x128xf32>
    %53 = vector.shape_cast %52 : vector<1x8x128xf32> to vector<8x128xf32>
    %54 = vector.broadcast %51 : f32 to vector<8x128xf32>
    %55 = arith.mulf %54, %53 : vector<8x128xf32>
    %56 = arith.addf %50, %55 : vector<8x128xf32>
    %c0_13 = arith.constant 0 : index
    %c9 = arith.constant 9 : index
    %57 = memref.load %arg1[%c0_13, %c9] : memref<5x10xf32, #tpu.memory_space<smem>>
    %58 = vector.extract_strided_slice %0 {offsets = [9, 0, 0], sizes = [1, 8, 128], strides = [1, 1, 1]} : vector<10x8x128xf32> to vector<1x8x128xf32>
    %59 = vector.shape_cast %58 : vector<1x8x128xf32> to vector<8x128xf32>
    %60 = vector.broadcast %57 : f32 to vector<8x128xf32>
    %61 = arith.mulf %60, %59 : vector<8x128xf32>
    %62 = arith.addf %56, %61 : vector<8x128xf32>
    %cst = arith.constant 0.000000e+00 : f32
    %63 = vector.broadcast %cst : f32 to vector<8x128xf32>
    %64 = arith.maximumf %62, %63 : vector<8x128xf32>
    %c0_14 = arith.constant 0 : index
    %c0_15 = arith.constant 0 : index
    %65 = memref.load %arg3[%c0_14, %c0_15] : memref<1x5xf32, #tpu.memory_space<smem>>
    %66 = vector.broadcast %65 : f32 to vector<8x128xf32>
    %67 = arith.mulf %66, %64 : vector<8x128xf32>
    %c1_16 = arith.constant 1 : index
    %68 = memref.load %arg2[%c1_16] : memref<5xf32, #tpu.memory_space<smem>>
    %c1_17 = arith.constant 1 : index
    %c0_18 = arith.constant 0 : index
    %69 = memref.load %arg1[%c1_17, %c0_18] : memref<5x10xf32, #tpu.memory_space<smem>>
    %70 = vector.extract_strided_slice %0 {offsets = [0, 0, 0], sizes = [1, 8, 128], strides = [1, 1, 1]} : vector<10x8x128xf32> to vector<1x8x128xf32>
    %71 = vector.shape_cast %70 : vector<1x8x128xf32> to vector<8x128xf32>
    %72 = vector.broadcast %69 : f32 to vector<8x128xf32>
    %73 = arith.mulf %72, %71 : vector<8x128xf32>
    %74 = vector.broadcast %68 : f32 to vector<8x128xf32>
    %75 = arith.addf %74, %73 : vector<8x128xf32>
    %c1_19 = arith.constant 1 : index
    %c1_20 = arith.constant 1 : index
    %76 = memref.load %arg1[%c1_19, %c1_20] : memref<5x10xf32, #tpu.memory_space<smem>>
    %77 = vector.extract_strided_slice %0 {offsets = [1, 0, 0], sizes = [1, 8, 128], strides = [1, 1, 1]} : vector<10x8x128xf32> to vector<1x8x128xf32>
    %78 = vector.shape_cast %77 : vector<1x8x128xf32> to vector<8x128xf32>
    %79 = vector.broadcast %76 : f32 to vector<8x128xf32>
    %80 = arith.mulf %79, %78 : vector<8x128xf32>
    %81 = arith.addf %75, %80 : vector<8x128xf32>
    %c1_21 = arith.constant 1 : index
    %c2_22 = arith.constant 2 : index
    %82 = memref.load %arg1[%c1_21, %c2_22] : memref<5x10xf32, #tpu.memory_space<smem>>
    %83 = vector.extract_strided_slice %0 {offsets = [2, 0, 0], sizes = [1, 8, 128], strides = [1, 1, 1]} : vector<10x8x128xf32> to vector<1x8x128xf32>
    %84 = vector.shape_cast %83 : vector<1x8x128xf32> to vector<8x128xf32>
    %85 = vector.broadcast %82 : f32 to vector<8x128xf32>
    %86 = arith.mulf %85, %84 : vector<8x128xf32>
    %87 = arith.addf %81, %86 : vector<8x128xf32>
    %c1_23 = arith.constant 1 : index
    %c3_24 = arith.constant 3 : index
    %88 = memref.load %arg1[%c1_23, %c3_24] : memref<5x10xf32, #tpu.memory_space<smem>>
    %89 = vector.extract_strided_slice %0 {offsets = [3, 0, 0], sizes = [1, 8, 128], strides = [1, 1, 1]} : vector<10x8x128xf32> to vector<1x8x128xf32>
    %90 = vector.shape_cast %89 : vector<1x8x128xf32> to vector<8x128xf32>
    %91 = vector.broadcast %88 : f32 to vector<8x128xf32>
    %92 = arith.mulf %91, %90 : vector<8x128xf32>
    %93 = arith.addf %87, %92 : vector<8x128xf32>
    %c1_25 = arith.constant 1 : index
    %c4_26 = arith.constant 4 : index
    %94 = memref.load %arg1[%c1_25, %c4_26] : memref<5x10xf32, #tpu.memory_space<smem>>
    %95 = vector.extract_strided_slice %0 {offsets = [4, 0, 0], sizes = [1, 8, 128], strides = [1, 1, 1]} : vector<10x8x128xf32> to vector<1x8x128xf32>
    %96 = vector.shape_cast %95 : vector<1x8x128xf32> to vector<8x128xf32>
    %97 = vector.broadcast %94 : f32 to vector<8x128xf32>
    %98 = arith.mulf %97, %96 : vector<8x128xf32>
    %99 = arith.addf %93, %98 : vector<8x128xf32>
    %c1_27 = arith.constant 1 : index
    %c5_28 = arith.constant 5 : index
    %100 = memref.load %arg1[%c1_27, %c5_28] : memref<5x10xf32, #tpu.memory_space<smem>>
    %101 = vector.extract_strided_slice %0 {offsets = [5, 0, 0], sizes = [1, 8, 128], strides = [1, 1, 1]} : vector<10x8x128xf32> to vector<1x8x128xf32>
    %102 = vector.shape_cast %101 : vector<1x8x128xf32> to vector<8x128xf32>
    %103 = vector.broadcast %100 : f32 to vector<8x128xf32>
    %104 = arith.mulf %103, %102 : vector<8x128xf32>
    %105 = arith.addf %99, %104 : vector<8x128xf32>
    %c1_29 = arith.constant 1 : index
    %c6_30 = arith.constant 6 : index
    %106 = memref.load %arg1[%c1_29, %c6_30] : memref<5x10xf32, #tpu.memory_space<smem>>
    %107 = vector.extract_strided_slice %0 {offsets = [6, 0, 0], sizes = [1, 8, 128], strides = [1, 1, 1]} : vector<10x8x128xf32> to vector<1x8x128xf32>
    %108 = vector.shape_cast %107 : vector<1x8x128xf32> to vector<8x128xf32>
    %109 = vector.broadcast %106 : f32 to vector<8x128xf32>
    %110 = arith.mulf %109, %108 : vector<8x128xf32>
    %111 = arith.addf %105, %110 : vector<8x128xf32>
    %c1_31 = arith.constant 1 : index
    %c7_32 = arith.constant 7 : index
    %112 = memref.load %arg1[%c1_31, %c7_32] : memref<5x10xf32, #tpu.memory_space<smem>>
    %113 = vector.extract_strided_slice %0 {offsets = [7, 0, 0], sizes = [1, 8, 128], strides = [1, 1, 1]} : vector<10x8x128xf32> to vector<1x8x128xf32>
    %114 = vector.shape_cast %113 : vector<1x8x128xf32> to vector<8x128xf32>
    %115 = vector.broadcast %112 : f32 to vector<8x128xf32>
    %116 = arith.mulf %115, %114 : vector<8x128xf32>
    %117 = arith.addf %111, %116 : vector<8x128xf32>
    %c1_33 = arith.constant 1 : index
    %c8_34 = arith.constant 8 : index
    %118 = memref.load %arg1[%c1_33, %c8_34] : memref<5x10xf32, #tpu.memory_space<smem>>
    %119 = vector.extract_strided_slice %0 {offsets = [8, 0, 0], sizes = [1, 8, 128], strides = [1, 1, 1]} : vector<10x8x128xf32> to vector<1x8x128xf32>
    %120 = vector.shape_cast %119 : vector<1x8x128xf32> to vector<8x128xf32>
    %121 = vector.broadcast %118 : f32 to vector<8x128xf32>
    %122 = arith.mulf %121, %120 : vector<8x128xf32>
    %123 = arith.addf %117, %122 : vector<8x128xf32>
    %c1_35 = arith.constant 1 : index
    %c9_36 = arith.constant 9 : index
    %124 = memref.load %arg1[%c1_35, %c9_36] : memref<5x10xf32, #tpu.memory_space<smem>>
    %125 = vector.extract_strided_slice %0 {offsets = [9, 0, 0], sizes = [1, 8, 128], strides = [1, 1, 1]} : vector<10x8x128xf32> to vector<1x8x128xf32>
    %126 = vector.shape_cast %125 : vector<1x8x128xf32> to vector<8x128xf32>
    %127 = vector.broadcast %124 : f32 to vector<8x128xf32>
    %128 = arith.mulf %127, %126 : vector<8x128xf32>
    %129 = arith.addf %123, %128 : vector<8x128xf32>
    %cst_37 = arith.constant 0.000000e+00 : f32
    %130 = vector.broadcast %cst_37 : f32 to vector<8x128xf32>
    %131 = arith.maximumf %129, %130 : vector<8x128xf32>
    %c0_38 = arith.constant 0 : index
    %c1_39 = arith.constant 1 : index
    %132 = memref.load %arg3[%c0_38, %c1_39] : memref<1x5xf32, #tpu.memory_space<smem>>
    %133 = vector.broadcast %132 : f32 to vector<8x128xf32>
    %134 = arith.mulf %133, %131 : vector<8x128xf32>
    %135 = arith.addf %67, %134 : vector<8x128xf32>
    %c2_40 = arith.constant 2 : index
    %136 = memref.load %arg2[%c2_40] : memref<5xf32, #tpu.memory_space<smem>>
    %c2_41 = arith.constant 2 : index
    %c0_42 = arith.constant 0 : index
    %137 = memref.load %arg1[%c2_41, %c0_42] : memref<5x10xf32, #tpu.memory_space<smem>>
    %138 = vector.extract_strided_slice %0 {offsets = [0, 0, 0], sizes = [1, 8, 128], strides = [1, 1, 1]} : vector<10x8x128xf32> to vector<1x8x128xf32>
    %139 = vector.shape_cast %138 : vector<1x8x128xf32> to vector<8x128xf32>
    %140 = vector.broadcast %137 : f32 to vector<8x128xf32>
    %141 = arith.mulf %140, %139 : vector<8x128xf32>
    %142 = vector.broadcast %136 : f32 to vector<8x128xf32>
    %143 = arith.addf %142, %141 : vector<8x128xf32>
    %c2_43 = arith.constant 2 : index
    %c1_44 = arith.constant 1 : index
    %144 = memref.load %arg1[%c2_43, %c1_44] : memref<5x10xf32, #tpu.memory_space<smem>>
    %145 = vector.extract_strided_slice %0 {offsets = [1, 0, 0], sizes = [1, 8, 128], strides = [1, 1, 1]} : vector<10x8x128xf32> to vector<1x8x128xf32>
    %146 = vector.shape_cast %145 : vector<1x8x128xf32> to vector<8x128xf32>
    %147 = vector.broadcast %144 : f32 to vector<8x128xf32>
    %148 = arith.mulf %147, %146 : vector<8x128xf32>
    %149 = arith.addf %143, %148 : vector<8x128xf32>
    %c2_45 = arith.constant 2 : index
    %c2_46 = arith.constant 2 : index
    %150 = memref.load %arg1[%c2_45, %c2_46] : memref<5x10xf32, #tpu.memory_space<smem>>
    %151 = vector.extract_strided_slice %0 {offsets = [2, 0, 0], sizes = [1, 8, 128], strides = [1, 1, 1]} : vector<10x8x128xf32> to vector<1x8x128xf32>
    %152 = vector.shape_cast %151 : vector<1x8x128xf32> to vector<8x128xf32>
    %153 = vector.broadcast %150 : f32 to vector<8x128xf32>
    %154 = arith.mulf %153, %152 : vector<8x128xf32>
    %155 = arith.addf %149, %154 : vector<8x128xf32>
    %c2_47 = arith.constant 2 : index
    %c3_48 = arith.constant 3 : index
    %156 = memref.load %arg1[%c2_47, %c3_48] : memref<5x10xf32, #tpu.memory_space<smem>>
    %157 = vector.extract_strided_slice %0 {offsets = [3, 0, 0], sizes = [1, 8, 128], strides = [1, 1, 1]} : vector<10x8x128xf32> to vector<1x8x128xf32>
    %158 = vector.shape_cast %157 : vector<1x8x128xf32> to vector<8x128xf32>
    %159 = vector.broadcast %156 : f32 to vector<8x128xf32>
    %160 = arith.mulf %159, %158 : vector<8x128xf32>
    %161 = arith.addf %155, %160 : vector<8x128xf32>
    %c2_49 = arith.constant 2 : index
    %c4_50 = arith.constant 4 : index
    %162 = memref.load %arg1[%c2_49, %c4_50] : memref<5x10xf32, #tpu.memory_space<smem>>
    %163 = vector.extract_strided_slice %0 {offsets = [4, 0, 0], sizes = [1, 8, 128], strides = [1, 1, 1]} : vector<10x8x128xf32> to vector<1x8x128xf32>
    %164 = vector.shape_cast %163 : vector<1x8x128xf32> to vector<8x128xf32>
    %165 = vector.broadcast %162 : f32 to vector<8x128xf32>
    %166 = arith.mulf %165, %164 : vector<8x128xf32>
    %167 = arith.addf %161, %166 : vector<8x128xf32>
    %c2_51 = arith.constant 2 : index
    %c5_52 = arith.constant 5 : index
    %168 = memref.load %arg1[%c2_51, %c5_52] : memref<5x10xf32, #tpu.memory_space<smem>>
    %169 = vector.extract_strided_slice %0 {offsets = [5, 0, 0], sizes = [1, 8, 128], strides = [1, 1, 1]} : vector<10x8x128xf32> to vector<1x8x128xf32>
    %170 = vector.shape_cast %169 : vector<1x8x128xf32> to vector<8x128xf32>
    %171 = vector.broadcast %168 : f32 to vector<8x128xf32>
    %172 = arith.mulf %171, %170 : vector<8x128xf32>
    %173 = arith.addf %167, %172 : vector<8x128xf32>
    %c2_53 = arith.constant 2 : index
    %c6_54 = arith.constant 6 : index
    %174 = memref.load %arg1[%c2_53, %c6_54] : memref<5x10xf32, #tpu.memory_space<smem>>
    %175 = vector.extract_strided_slice %0 {offsets = [6, 0, 0], sizes = [1, 8, 128], strides = [1, 1, 1]} : vector<10x8x128xf32> to vector<1x8x128xf32>
    %176 = vector.shape_cast %175 : vector<1x8x128xf32> to vector<8x128xf32>
    %177 = vector.broadcast %174 : f32 to vector<8x128xf32>
    %178 = arith.mulf %177, %176 : vector<8x128xf32>
    %179 = arith.addf %173, %178 : vector<8x128xf32>
    %c2_55 = arith.constant 2 : index
    %c7_56 = arith.constant 7 : index
    %180 = memref.load %arg1[%c2_55, %c7_56] : memref<5x10xf32, #tpu.memory_space<smem>>
    %181 = vector.extract_strided_slice %0 {offsets = [7, 0, 0], sizes = [1, 8, 128], strides = [1, 1, 1]} : vector<10x8x128xf32> to vector<1x8x128xf32>
    %182 = vector.shape_cast %181 : vector<1x8x128xf32> to vector<8x128xf32>
    %183 = vector.broadcast %180 : f32 to vector<8x128xf32>
    %184 = arith.mulf %183, %182 : vector<8x128xf32>
    %185 = arith.addf %179, %184 : vector<8x128xf32>
    %c2_57 = arith.constant 2 : index
    %c8_58 = arith.constant 8 : index
    %186 = memref.load %arg1[%c2_57, %c8_58] : memref<5x10xf32, #tpu.memory_space<smem>>
    %187 = vector.extract_strided_slice %0 {offsets = [8, 0, 0], sizes = [1, 8, 128], strides = [1, 1, 1]} : vector<10x8x128xf32> to vector<1x8x128xf32>
    %188 = vector.shape_cast %187 : vector<1x8x128xf32> to vector<8x128xf32>
    %189 = vector.broadcast %186 : f32 to vector<8x128xf32>
    %190 = arith.mulf %189, %188 : vector<8x128xf32>
    %191 = arith.addf %185, %190 : vector<8x128xf32>
    %c2_59 = arith.constant 2 : index
    %c9_60 = arith.constant 9 : index
    %192 = memref.load %arg1[%c2_59, %c9_60] : memref<5x10xf32, #tpu.memory_space<smem>>
    %193 = vector.extract_strided_slice %0 {offsets = [9, 0, 0], sizes = [1, 8, 128], strides = [1, 1, 1]} : vector<10x8x128xf32> to vector<1x8x128xf32>
    %194 = vector.shape_cast %193 : vector<1x8x128xf32> to vector<8x128xf32>
    %195 = vector.broadcast %192 : f32 to vector<8x128xf32>
    %196 = arith.mulf %195, %194 : vector<8x128xf32>
    %197 = arith.addf %191, %196 : vector<8x128xf32>
    %cst_61 = arith.constant 0.000000e+00 : f32
    %198 = vector.broadcast %cst_61 : f32 to vector<8x128xf32>
    %199 = arith.maximumf %197, %198 : vector<8x128xf32>
    %c0_62 = arith.constant 0 : index
    %c2_63 = arith.constant 2 : index
    %200 = memref.load %arg3[%c0_62, %c2_63] : memref<1x5xf32, #tpu.memory_space<smem>>
    %201 = vector.broadcast %200 : f32 to vector<8x128xf32>
    %202 = arith.mulf %201, %199 : vector<8x128xf32>
    %203 = arith.addf %135, %202 : vector<8x128xf32>
    %c3_64 = arith.constant 3 : index
    %204 = memref.load %arg2[%c3_64] : memref<5xf32, #tpu.memory_space<smem>>
    %c3_65 = arith.constant 3 : index
    %c0_66 = arith.constant 0 : index
    %205 = memref.load %arg1[%c3_65, %c0_66] : memref<5x10xf32, #tpu.memory_space<smem>>
    %206 = vector.extract_strided_slice %0 {offsets = [0, 0, 0], sizes = [1, 8, 128], strides = [1, 1, 1]} : vector<10x8x128xf32> to vector<1x8x128xf32>
    %207 = vector.shape_cast %206 : vector<1x8x128xf32> to vector<8x128xf32>
    %208 = vector.broadcast %205 : f32 to vector<8x128xf32>
    %209 = arith.mulf %208, %207 : vector<8x128xf32>
    %210 = vector.broadcast %204 : f32 to vector<8x128xf32>
    %211 = arith.addf %210, %209 : vector<8x128xf32>
    %c3_67 = arith.constant 3 : index
    %c1_68 = arith.constant 1 : index
    %212 = memref.load %arg1[%c3_67, %c1_68] : memref<5x10xf32, #tpu.memory_space<smem>>
    %213 = vector.extract_strided_slice %0 {offsets = [1, 0, 0], sizes = [1, 8, 128], strides = [1, 1, 1]} : vector<10x8x128xf32> to vector<1x8x128xf32>
    %214 = vector.shape_cast %213 : vector<1x8x128xf32> to vector<8x128xf32>
    %215 = vector.broadcast %212 : f32 to vector<8x128xf32>
    %216 = arith.mulf %215, %214 : vector<8x128xf32>
    %217 = arith.addf %211, %216 : vector<8x128xf32>
    %c3_69 = arith.constant 3 : index
    %c2_70 = arith.constant 2 : index
    %218 = memref.load %arg1[%c3_69, %c2_70] : memref<5x10xf32, #tpu.memory_space<smem>>
    %219 = vector.extract_strided_slice %0 {offsets = [2, 0, 0], sizes = [1, 8, 128], strides = [1, 1, 1]} : vector<10x8x128xf32> to vector<1x8x128xf32>
    %220 = vector.shape_cast %219 : vector<1x8x128xf32> to vector<8x128xf32>
    %221 = vector.broadcast %218 : f32 to vector<8x128xf32>
    %222 = arith.mulf %221, %220 : vector<8x128xf32>
    %223 = arith.addf %217, %222 : vector<8x128xf32>
    %c3_71 = arith.constant 3 : index
    %c3_72 = arith.constant 3 : index
    %224 = memref.load %arg1[%c3_71, %c3_72] : memref<5x10xf32, #tpu.memory_space<smem>>
    %225 = vector.extract_strided_slice %0 {offsets = [3, 0, 0], sizes = [1, 8, 128], strides = [1, 1, 1]} : vector<10x8x128xf32> to vector<1x8x128xf32>
    %226 = vector.shape_cast %225 : vector<1x8x128xf32> to vector<8x128xf32>
    %227 = vector.broadcast %224 : f32 to vector<8x128xf32>
    %228 = arith.mulf %227, %226 : vector<8x128xf32>
    %229 = arith.addf %223, %228 : vector<8x128xf32>
    %c3_73 = arith.constant 3 : index
    %c4_74 = arith.constant 4 : index
    %230 = memref.load %arg1[%c3_73, %c4_74] : memref<5x10xf32, #tpu.memory_space<smem>>
    %231 = vector.extract_strided_slice %0 {offsets = [4, 0, 0], sizes = [1, 8, 128], strides = [1, 1, 1]} : vector<10x8x128xf32> to vector<1x8x128xf32>
    %232 = vector.shape_cast %231 : vector<1x8x128xf32> to vector<8x128xf32>
    %233 = vector.broadcast %230 : f32 to vector<8x128xf32>
    %234 = arith.mulf %233, %232 : vector<8x128xf32>
    %235 = arith.addf %229, %234 : vector<8x128xf32>
    %c3_75 = arith.constant 3 : index
    %c5_76 = arith.constant 5 : index
    %236 = memref.load %arg1[%c3_75, %c5_76] : memref<5x10xf32, #tpu.memory_space<smem>>
    %237 = vector.extract_strided_slice %0 {offsets = [5, 0, 0], sizes = [1, 8, 128], strides = [1, 1, 1]} : vector<10x8x128xf32> to vector<1x8x128xf32>
    %238 = vector.shape_cast %237 : vector<1x8x128xf32> to vector<8x128xf32>
    %239 = vector.broadcast %236 : f32 to vector<8x128xf32>
    %240 = arith.mulf %239, %238 : vector<8x128xf32>
    %241 = arith.addf %235, %240 : vector<8x128xf32>
    %c3_77 = arith.constant 3 : index
    %c6_78 = arith.constant 6 : index
    %242 = memref.load %arg1[%c3_77, %c6_78] : memref<5x10xf32, #tpu.memory_space<smem>>
    %243 = vector.extract_strided_slice %0 {offsets = [6, 0, 0], sizes = [1, 8, 128], strides = [1, 1, 1]} : vector<10x8x128xf32> to vector<1x8x128xf32>
    %244 = vector.shape_cast %243 : vector<1x8x128xf32> to vector<8x128xf32>
    %245 = vector.broadcast %242 : f32 to vector<8x128xf32>
    %246 = arith.mulf %245, %244 : vector<8x128xf32>
    %247 = arith.addf %241, %246 : vector<8x128xf32>
    %c3_79 = arith.constant 3 : index
    %c7_80 = arith.constant 7 : index
    %248 = memref.load %arg1[%c3_79, %c7_80] : memref<5x10xf32, #tpu.memory_space<smem>>
    %249 = vector.extract_strided_slice %0 {offsets = [7, 0, 0], sizes = [1, 8, 128], strides = [1, 1, 1]} : vector<10x8x128xf32> to vector<1x8x128xf32>
    %250 = vector.shape_cast %249 : vector<1x8x128xf32> to vector<8x128xf32>
    %251 = vector.broadcast %248 : f32 to vector<8x128xf32>
    %252 = arith.mulf %251, %250 : vector<8x128xf32>
    %253 = arith.addf %247, %252 : vector<8x128xf32>
    %c3_81 = arith.constant 3 : index
    %c8_82 = arith.constant 8 : index
    %254 = memref.load %arg1[%c3_81, %c8_82] : memref<5x10xf32, #tpu.memory_space<smem>>
    %255 = vector.extract_strided_slice %0 {offsets = [8, 0, 0], sizes = [1, 8, 128], strides = [1, 1, 1]} : vector<10x8x128xf32> to vector<1x8x128xf32>
    %256 = vector.shape_cast %255 : vector<1x8x128xf32> to vector<8x128xf32>
    %257 = vector.broadcast %254 : f32 to vector<8x128xf32>
    %258 = arith.mulf %257, %256 : vector<8x128xf32>
    %259 = arith.addf %253, %258 : vector<8x128xf32>
    %c3_83 = arith.constant 3 : index
    %c9_84 = arith.constant 9 : index
    %260 = memref.load %arg1[%c3_83, %c9_84] : memref<5x10xf32, #tpu.memory_space<smem>>
    %261 = vector.extract_strided_slice %0 {offsets = [9, 0, 0], sizes = [1, 8, 128], strides = [1, 1, 1]} : vector<10x8x128xf32> to vector<1x8x128xf32>
    %262 = vector.shape_cast %261 : vector<1x8x128xf32> to vector<8x128xf32>
    %263 = vector.broadcast %260 : f32 to vector<8x128xf32>
    %264 = arith.mulf %263, %262 : vector<8x128xf32>
    %265 = arith.addf %259, %264 : vector<8x128xf32>
    %cst_85 = arith.constant 0.000000e+00 : f32
    %266 = vector.broadcast %cst_85 : f32 to vector<8x128xf32>
    %267 = arith.maximumf %265, %266 : vector<8x128xf32>
    %c0_86 = arith.constant 0 : index
    %c3_87 = arith.constant 3 : index
    %268 = memref.load %arg3[%c0_86, %c3_87] : memref<1x5xf32, #tpu.memory_space<smem>>
    %269 = vector.broadcast %268 : f32 to vector<8x128xf32>
    %270 = arith.mulf %269, %267 : vector<8x128xf32>
    %271 = arith.addf %203, %270 : vector<8x128xf32>
    %c4_88 = arith.constant 4 : index
    %272 = memref.load %arg2[%c4_88] : memref<5xf32, #tpu.memory_space<smem>>
    %c4_89 = arith.constant 4 : index
    %c0_90 = arith.constant 0 : index
    %273 = memref.load %arg1[%c4_89, %c0_90] : memref<5x10xf32, #tpu.memory_space<smem>>
    %274 = vector.extract_strided_slice %0 {offsets = [0, 0, 0], sizes = [1, 8, 128], strides = [1, 1, 1]} : vector<10x8x128xf32> to vector<1x8x128xf32>
    %275 = vector.shape_cast %274 : vector<1x8x128xf32> to vector<8x128xf32>
    %276 = vector.broadcast %273 : f32 to vector<8x128xf32>
    %277 = arith.mulf %276, %275 : vector<8x128xf32>
    %278 = vector.broadcast %272 : f32 to vector<8x128xf32>
    %279 = arith.addf %278, %277 : vector<8x128xf32>
    %c4_91 = arith.constant 4 : index
    %c1_92 = arith.constant 1 : index
    %280 = memref.load %arg1[%c4_91, %c1_92] : memref<5x10xf32, #tpu.memory_space<smem>>
    %281 = vector.extract_strided_slice %0 {offsets = [1, 0, 0], sizes = [1, 8, 128], strides = [1, 1, 1]} : vector<10x8x128xf32> to vector<1x8x128xf32>
    %282 = vector.shape_cast %281 : vector<1x8x128xf32> to vector<8x128xf32>
    %283 = vector.broadcast %280 : f32 to vector<8x128xf32>
    %284 = arith.mulf %283, %282 : vector<8x128xf32>
    %285 = arith.addf %279, %284 : vector<8x128xf32>
    %c4_93 = arith.constant 4 : index
    %c2_94 = arith.constant 2 : index
    %286 = memref.load %arg1[%c4_93, %c2_94] : memref<5x10xf32, #tpu.memory_space<smem>>
    %287 = vector.extract_strided_slice %0 {offsets = [2, 0, 0], sizes = [1, 8, 128], strides = [1, 1, 1]} : vector<10x8x128xf32> to vector<1x8x128xf32>
    %288 = vector.shape_cast %287 : vector<1x8x128xf32> to vector<8x128xf32>
    %289 = vector.broadcast %286 : f32 to vector<8x128xf32>
    %290 = arith.mulf %289, %288 : vector<8x128xf32>
    %291 = arith.addf %285, %290 : vector<8x128xf32>
    %c4_95 = arith.constant 4 : index
    %c3_96 = arith.constant 3 : index
    %292 = memref.load %arg1[%c4_95, %c3_96] : memref<5x10xf32, #tpu.memory_space<smem>>
    %293 = vector.extract_strided_slice %0 {offsets = [3, 0, 0], sizes = [1, 8, 128], strides = [1, 1, 1]} : vector<10x8x128xf32> to vector<1x8x128xf32>
    %294 = vector.shape_cast %293 : vector<1x8x128xf32> to vector<8x128xf32>
    %295 = vector.broadcast %292 : f32 to vector<8x128xf32>
    %296 = arith.mulf %295, %294 : vector<8x128xf32>
    %297 = arith.addf %291, %296 : vector<8x128xf32>
    %c4_97 = arith.constant 4 : index
    %c4_98 = arith.constant 4 : index
    %298 = memref.load %arg1[%c4_97, %c4_98] : memref<5x10xf32, #tpu.memory_space<smem>>
    %299 = vector.extract_strided_slice %0 {offsets = [4, 0, 0], sizes = [1, 8, 128], strides = [1, 1, 1]} : vector<10x8x128xf32> to vector<1x8x128xf32>
    %300 = vector.shape_cast %299 : vector<1x8x128xf32> to vector<8x128xf32>
    %301 = vector.broadcast %298 : f32 to vector<8x128xf32>
    %302 = arith.mulf %301, %300 : vector<8x128xf32>
    %303 = arith.addf %297, %302 : vector<8x128xf32>
    %c4_99 = arith.constant 4 : index
    %c5_100 = arith.constant 5 : index
    %304 = memref.load %arg1[%c4_99, %c5_100] : memref<5x10xf32, #tpu.memory_space<smem>>
    %305 = vector.extract_strided_slice %0 {offsets = [5, 0, 0], sizes = [1, 8, 128], strides = [1, 1, 1]} : vector<10x8x128xf32> to vector<1x8x128xf32>
    %306 = vector.shape_cast %305 : vector<1x8x128xf32> to vector<8x128xf32>
    %307 = vector.broadcast %304 : f32 to vector<8x128xf32>
    %308 = arith.mulf %307, %306 : vector<8x128xf32>
    %309 = arith.addf %303, %308 : vector<8x128xf32>
    %c4_101 = arith.constant 4 : index
    %c6_102 = arith.constant 6 : index
    %310 = memref.load %arg1[%c4_101, %c6_102] : memref<5x10xf32, #tpu.memory_space<smem>>
    %311 = vector.extract_strided_slice %0 {offsets = [6, 0, 0], sizes = [1, 8, 128], strides = [1, 1, 1]} : vector<10x8x128xf32> to vector<1x8x128xf32>
    %312 = vector.shape_cast %311 : vector<1x8x128xf32> to vector<8x128xf32>
    %313 = vector.broadcast %310 : f32 to vector<8x128xf32>
    %314 = arith.mulf %313, %312 : vector<8x128xf32>
    %315 = arith.addf %309, %314 : vector<8x128xf32>
    %c4_103 = arith.constant 4 : index
    %c7_104 = arith.constant 7 : index
    %316 = memref.load %arg1[%c4_103, %c7_104] : memref<5x10xf32, #tpu.memory_space<smem>>
    %317 = vector.extract_strided_slice %0 {offsets = [7, 0, 0], sizes = [1, 8, 128], strides = [1, 1, 1]} : vector<10x8x128xf32> to vector<1x8x128xf32>
    %318 = vector.shape_cast %317 : vector<1x8x128xf32> to vector<8x128xf32>
    %319 = vector.broadcast %316 : f32 to vector<8x128xf32>
    %320 = arith.mulf %319, %318 : vector<8x128xf32>
    %321 = arith.addf %315, %320 : vector<8x128xf32>
    %c4_105 = arith.constant 4 : index
    %c8_106 = arith.constant 8 : index
    %322 = memref.load %arg1[%c4_105, %c8_106] : memref<5x10xf32, #tpu.memory_space<smem>>
    %323 = vector.extract_strided_slice %0 {offsets = [8, 0, 0], sizes = [1, 8, 128], strides = [1, 1, 1]} : vector<10x8x128xf32> to vector<1x8x128xf32>
    %324 = vector.shape_cast %323 : vector<1x8x128xf32> to vector<8x128xf32>
    %325 = vector.broadcast %322 : f32 to vector<8x128xf32>
    %326 = arith.mulf %325, %324 : vector<8x128xf32>
    %327 = arith.addf %321, %326 : vector<8x128xf32>
    %c4_107 = arith.constant 4 : index
    %c9_108 = arith.constant 9 : index
    %328 = memref.load %arg1[%c4_107, %c9_108] : memref<5x10xf32, #tpu.memory_space<smem>>
    %329 = vector.extract_strided_slice %0 {offsets = [9, 0, 0], sizes = [1, 8, 128], strides = [1, 1, 1]} : vector<10x8x128xf32> to vector<1x8x128xf32>
    %330 = vector.shape_cast %329 : vector<1x8x128xf32> to vector<8x128xf32>
    %331 = vector.broadcast %328 : f32 to vector<8x128xf32>
    %332 = arith.mulf %331, %330 : vector<8x128xf32>
    %333 = arith.addf %327, %332 : vector<8x128xf32>
    %cst_109 = arith.constant 0.000000e+00 : f32
    %334 = vector.broadcast %cst_109 : f32 to vector<8x128xf32>
    %335 = arith.maximumf %333, %334 : vector<8x128xf32>
    %c0_110 = arith.constant 0 : index
    %c4_111 = arith.constant 4 : index
    %336 = memref.load %arg3[%c0_110, %c4_111] : memref<1x5xf32, #tpu.memory_space<smem>>
    %337 = vector.broadcast %336 : f32 to vector<8x128xf32>
    %338 = arith.mulf %337, %335 : vector<8x128xf32>
    %339 = arith.addf %271, %338 : vector<8x128xf32>
    %c0_112 = arith.constant 0 : index
    %340 = memref.load %arg4[%c0_112] : memref<1xf32, #tpu.memory_space<smem>>
    %341 = vector.broadcast %340 : f32 to vector<8x128xf32>
    %342 = arith.addf %339, %341 : vector<8x128xf32>
    %c0_113 = arith.constant 0 : index
    %c0_114 = arith.constant 0 : index
    %343 = vector.load %arg6[%c0_113, %c0_114] : memref<8x128xf32, #tpu.memory_space<vmem>>, vector<8x128xf32>
    tpu.vector_store %arg6[%c0_113, %c0_114], %342 {strides = array<i32>} : memref<8x128xf32, #tpu.memory_space<vmem>>, vector<8x128xf32>,
    return
  }
  func.func @transform_0(%arg0: i32) -> (i32, i32) {
    %c0_i32 = arith.constant 0 : i32
    %c0_i32_0 = arith.constant 0 : i32
    %c0_i32_1 = arith.constant 0 : i32
    return %c0_i32, %c0_i32_0 : i32, i32
  }
  func.func @transform_1(%arg0: i32) -> i32 {
    %c0_i32 = arith.constant 0 : i32
    %c0_i32_0 = arith.constant 0 : i32
    return %c0_i32 : i32
  }
  func.func @transform_2(%arg0: i32) -> (i32, i32) {
    %c0_i32 = arith.constant 0 : i32
    %c0_i32_0 = arith.constant 0 : i32
    %c0_i32_1 = arith.constant 0 : i32
    return %c0_i32, %c0_i32_0 : i32, i32
  }
  func.func @transform_3(%arg0: i32) -> i32 {
    %c0_i32 = arith.constant 0 : i32
    %c0_i32_0 = arith.constant 0 : i32
    return %c0_i32 : i32
  }
  func.func @transform_4(%arg0: i32) -> (i32, i32, i32) {
    %c0_i32 = arith.constant 0 : i32
    %c0_i32_0 = arith.constant 0 : i32
    %c0_i32_1 = arith.constant 0 : i32
    return %c0_i32, %arg0, %c0_i32_0 : i32, i32, i32
  }
  func.func @transform_5(%arg0: i32) -> (i32, i32) {
    %c0_i32 = arith.constant 0 : i32
    %c0_i32_0 = arith.constant 0 : i32
    return %arg0, %c0_i32 : i32, i32
  }
}

</mosaic_0001>

<llo_original>
// kernel: tpu_custom_call.1
$region0: #{tpu_custom_call.1}
  #allocation0 [shape = 'u32[]', space=smem, size = 0x4, offset = 0x4, fixed_abs, tag = 'smem constant byte address 0x4 - core index']
  #allocation1 [shape = 'u32[72,128]{1,0:T(1,128)}', space=vmem, size = 0x9000, scoped, tag = 'internal scratch']
  #allocation2 [shape = 'f32[1]{0:T(128)S(6)}', space=smem, size = 0x200, scoped, tag = 'scoped memory for tpu_custom_call.1']
  %s0 = inlined_call_operand.hbm [shape: f32[5,10], index: 0, kind: input, shape index: {}]
  %s1 = inlined_call_operand.vmem [shape: f32[5], index: 1, kind: input, shape index: {}]
  %s2 = inlined_call_operand.vmem [shape: f32[1,5], index: 2, kind: input, shape index: {}]
  %s3 = inlined_call_operand.<no memory space> [shape: f32[1], index: 3, kind: input, shape index: {}]
  %s4 = inlined_call_operand.hbm [shape: f32[10,8,128], index: 4, kind: input, shape index: {}]
  %s5 = inlined_call_operand.hbm [shape: f32[8,128], index: 5, kind: output, shape index: {}]
  %s6 = sld [smem:[#allocation0]]
  $region46: #{tpu_custom_call.1} parent=0
    _
  %s8 = ssub.s32 1, %s6
  %s9 = scalar_select 0, %s8, %s6
  %10 = sst [smem:[#allocation2]] %s3
  $region1: #{tpu_custom_call.1} parent=0
    #allocation3 [shape = 'u8[4096]{0}', space=smem, size = 0x1000, scoped, tag = 'input window, operand 0, single buffered']
    #allocation4 [shape = 's32[1]{0}', space=sflag, size = 0x4, scoped, tag = 'scoped memory for tpu_custom_call.1']
    #allocation5 [shape = 's32[1]{0}', space=sflag, size = 0x4, scoped, tag = 'scoped memory for tpu_custom_call.1']
    #allocation6 [shape = 's32[1]{0}', space=sflag, size = 0x4, scoped, tag = 'scoped memory for tpu_custom_call.1']
    #allocation7 [shape = 's32[1]{0}', space=sflag, size = 0x4, scoped, tag = 'scoped memory for tpu_custom_call.1']
    #allocation8 [shape = 'u8[512]{0}', space=smem, size = 0x200, scoped, tag = 'input window, operand 1, single buffered']
    #allocation9 [shape = 'u8[512]{0}', space=smem, size = 0x200, scoped, tag = 'input window, operand 2, single buffered']
    #allocation10 [shape = 's32[1]{0}', space=sflag, size = 0x4, scoped, tag = 'scoped memory for tpu_custom_call.1']
    #allocation11 [shape = 'u8[40960]{0}', space=vmem, size = 0xa000, scoped, tag = 'input window, operand 4, single buffered']
    #allocation12 [shape = 'u8[4096]{0}', space=vmem, size = 0x1000, scoped, tag = 'output window, operand 0, single buffered']
    %11 = vsyncpa [#allocation6], 0
    %12 = vsyncpa [#allocation7], 0
    %13 = vsyncpa [#allocation10], 0
    %14 = vsyncpa [#allocation4], 0
    %15 = vsyncpa [#allocation5], 0
    // Predicated region
    $region2: #{tpu_custom_call.1} parent=1 // pred_check
      _
    $region3: #{tpu_custom_call.1} parent=1 // pred_check_branch
      %17 = sbr.rel (0) target = $region5
    $region4: #{tpu_custom_call.1} parent=1 // pred_region
      %19 = vsyncadd [#allocation6], 0
      %s21 = sshll.u32 %s0, 4
      %s22 = int_to_ptr.hbm [resolvable:$true] %s21
      %24 = dma.hbm_to_smem %s22, 128, [#allocation3], [#allocation6]
    $region5: #{tpu_custom_call.1} parent=1 // pred_fallthru
      _
    // Predicated region
    $region6: #{tpu_custom_call.1} parent=1 // pred_check
      _
    $region7: #{tpu_custom_call.1} parent=1 // pred_check_branch
      %26 = sbr.rel (0) target = $region9
    $region8: #{tpu_custom_call.1} parent=1 // pred_region
      %28 = vsyncadd [#allocation7], 0
      %s30 = sshll.u32 %s1, 4
      %s31 = int_to_ptr.vmem [resolvable:$true] %s30
      %33 = dma.vmem_to_smem %s31, 16, [#allocation8], [#allocation7]
    $region9: #{tpu_custom_call.1} parent=1 // pred_fallthru
      _
    // Predicated region
    $region10: #{tpu_custom_call.1} parent=1 // pred_check
      _
    $region11: #{tpu_custom_call.1} parent=1 // pred_check_branch
      %35 = sbr.rel (0) target = $region13
    $region12: #{tpu_custom_call.1} parent=1 // pred_region
      %37 = vsyncadd [#allocation10], 0
      %s39 = sshll.u32 %s2, 4
      %s40 = int_to_ptr.vmem [resolvable:$true] %s39
      %42 = dma.vmem_to_smem %s40, 16, [#allocation9], [#allocation10]
    $region13: #{tpu_custom_call.1} parent=1 // pred_fallthru
      _
    // Predicated region
    $region14: #{tpu_custom_call.1} parent=1 // pred_check
      _
    $region15: #{tpu_custom_call.1} parent=1 // pred_check_branch
      %44 = sbr.rel (0) target = $region17
    $region16: #{tpu_custom_call.1} parent=1 // pred_region
      _
    $region17: #{tpu_custom_call.1} parent=1 // pred_fallthru
      _
    // Predicated region
    $region18: #{tpu_custom_call.1} parent=1 // pred_check
      _
    $region19: #{tpu_custom_call.1} parent=1 // pred_check_branch
      %46 = sbr.rel (0) target = $region21
    $region20: #{tpu_custom_call.1} parent=1 // pred_region
      %48 = vsyncadd [#allocation4], 0
      %s49 = sshll.u32 %s4, 4
      %s50 = int_to_ptr.hbm [resolvable:$true] %s49
      %s51 = sshll.u32 [#allocation11], 4
      %s52 = int_to_ptr.vmem [resolvable:$true] %s51
      %57 = dma.hbm_to_vmem [thread:$0]  %s50, 1280, %s52, [#allocation4], 128, 128, 8
    $region21: #{tpu_custom_call.1} parent=1 // pred_fallthru
      _
    // Predicated region
    $region22: #{tpu_custom_call.1} parent=1 // pred_check
      _
    $region23: #{tpu_custom_call.1} parent=1 // pred_check_branch
      %59 = sbr.rel (0) target = $region25
    $region24: #{tpu_custom_call.1} parent=1 // pred_region
      %61 = dma.done [#allocation6], 128
    $region25: #{tpu_custom_call.1} parent=1 // pred_fallthru
      _
    // Predicated region
    $region26: #{tpu_custom_call.1} parent=1 // pred_check
      _
    $region27: #{tpu_custom_call.1} parent=1 // pred_check_branch
      %63 = sbr.rel (0) target = $region29
    $region28: #{tpu_custom_call.1} parent=1 // pred_region
      %65 = dma.done [#allocation7], 16
    $region29: #{tpu_custom_call.1} parent=1 // pred_fallthru
      _
    // Predicated region
    $region30: #{tpu_custom_call.1} parent=1 // pred_check
      _
    $region31: #{tpu_custom_call.1} parent=1 // pred_check_branch
      %67 = sbr.rel (0) target = $region33
    $region32: #{tpu_custom_call.1} parent=1 // pred_region
      %69 = dma.done [#allocation10], 16
    $region33: #{tpu_custom_call.1} parent=1 // pred_fallthru
      _
    // Predicated region
    $region34: #{tpu_custom_call.1} parent=1 // pred_check
      _
    $region35: #{tpu_custom_call.1} parent=1 // pred_check_branch
      %71 = sbr.rel (0) target = $region37
    $region36: #{tpu_custom_call.1} parent=1 // pred_region
      %73 = dma.done [#allocation4], 1280
    $region37: #{tpu_custom_call.1} parent=1 // pred_fallthru
      _
    %74 = sfence
    %v75 = vld [vmem:[#allocation11] sm:$0xff]
    %v76 = vld [vmem:[#allocation11 + $0x8] sm:$0xff]
    %v77 = vld [vmem:[#allocation11 + $0x10] sm:$0xff]
    %v78 = vld [vmem:[#allocation11 + $0x18] sm:$0xff]
    %v79 = vld [vmem:[#allocation11 + $0x20] sm:$0xff]
    %v80 = vld [vmem:[#allocation11 + $0x28] sm:$0xff]
    %v81 = vld [vmem:[#allocation11 + $0x30] sm:$0xff]
    %v82 = vld [vmem:[#allocation11 + $0x38] sm:$0xff]
    %v83 = vld [vmem:[#allocation11 + $0x40] sm:$0xff]
    %v84 = vld [vmem:[#allocation11 + $0x48] sm:$0xff]
    %s85 = sld [smem:[#allocation8]]
    %s86 = sld [smem:[#allocation3]]
    %v87 = vstv %s86
    %v88 = vmul.f32 %v87, %v75
    %v89 = vstv %s85
    %v90 = vadd.f32 %v89, %v88
    %s91 = sld [smem:[#allocation3 + $0x1]]
    %v92 = vstv %s91
    %v93 = vmul.f32 %v92, %v76
    %v94 = vadd.f32 %v90, %v93
    %s95 = sld [smem:[#allocation3 + $0x2]]
    %v96 = vstv %s95
    %v97 = vmul.f32 %v96, %v77
    %v98 = vadd.f32 %v94, %v97
    %s99 = sld [smem:[#allocation3 + $0x3]]
    %v100 = vstv %s99
    %v101 = vmul.f32 %v100, %v78
    %v102 = vadd.f32 %v98, %v101
    %s103 = sld [smem:[#allocation3 + $0x4]]
    %v104 = vstv %s103
    %v105 = vmul.f32 %v104, %v79
    %v106 = vadd.f32 %v102, %v105
    %s107 = sld [smem:[#allocation3 + $0x5]]
    %v108 = vstv %s107
    %v109 = vmul.f32 %v108, %v80
    %v110 = vadd.f32 %v106, %v109
    %s111 = sld [smem:[#allocation3 + $0x6]]
    %v112 = vstv %s111
    %v113 = vmul.f32 %v112, %v81
    %v114 = vadd.f32 %v110, %v113
    %s115 = sld [smem:[#allocation3 + $0x7]]
    %v116 = vstv %s115
    %v117 = vmul.f32 %v116, %v82
    %v118 = vadd.f32 %v114, %v117
    %s119 = sld [smem:[#allocation3 + $0x8]]
    %v120 = vstv %s119
    %v121 = vmul.f32 %v120, %v83
    %v122 = vadd.f32 %v118, %v121
    %s123 = sld [smem:[#allocation3 + $0x9]]
    %v124 = vstv %s123
    %v125 = vmul.f32 %v124, %v84
    %v126 = vadd.f32 %v122, %v125
    %v127 = vmax.f32 %v126, 0.0
    %s128 = sld [smem:[#allocation9]]
    %v129 = vstv %s128
    %v130 = vmul.f32 %v129, %v127
    %s131 = sld [smem:[#allocation8 + $0x1]]
    %s132 = sld [smem:[#allocation3 + $0x80]]
    %v133 = vstv %s132
    %v134 = vmul.f32 %v133, %v75
    %v135 = vstv %s131
    %v136 = vadd.f32 %v135, %v134
    %s137 = sld [smem:[#allocation3 + $0x81]]
    %v138 = vstv %s137
    %v139 = vmul.f32 %v138, %v76
    %v140 = vadd.f32 %v136, %v139
    %s141 = sld [smem:[#allocation3 + $0x82]]
    %v142 = vstv %s141
    %v143 = vmul.f32 %v142, %v77
    %v144 = vadd.f32 %v140, %v143
    %s145 = sld [smem:[#allocation3 + $0x83]]
    %v146 = vstv %s145
    %v147 = vmul.f32 %v146, %v78
    %v148 = vadd.f32 %v144, %v147
    %s149 = sld [smem:[#allocation3 + $0x84]]
    %v150 = vstv %s149
    %v151 = vmul.f32 %v150, %v79
    %v152 = vadd.f32 %v148, %v151
    %s153 = sld [smem:[#allocation3 + $0x85]]
    %v154 = vstv %s153
    %v155 = vmul.f32 %v154, %v80
    %v156 = vadd.f32 %v152, %v155
    %s157 = sld [smem:[#allocation3 + $0x86]]
    %v158 = vstv %s157
    %v159 = vmul.f32 %v158, %v81
    %v160 = vadd.f32 %v156, %v159
    %s161 = sld [smem:[#allocation3 + $0x87]]
    %v162 = vstv %s161
    %v163 = vmul.f32 %v162, %v82
    %v164 = vadd.f32 %v160, %v163
    %s165 = sld [smem:[#allocation3 + $0x88]]
    %v166 = vstv %s165
    %v167 = vmul.f32 %v166, %v83
    %v168 = vadd.f32 %v164, %v167
    %s169 = sld [smem:[#allocation3 + $0x89]]
    %v170 = vstv %s169
    %v171 = vmul.f32 %v170, %v84
    %v172 = vadd.f32 %v168, %v171
    %v173 = vmax.f32 %v172, 0.0
    %s174 = sld [smem:[#allocation9 + $0x1]]
    %v175 = vstv %s174
    %v176 = vmul.f32 %v175, %v173
    %v177 = vadd.f32 %v130, %v176
    %s178 = sld [smem:[#allocation8 + $0x2]]
    %s179 = sld [smem:[#allocation3 + $0x100]]
    %v180 = vstv %s179
    %v181 = vmul.f32 %v180, %v75
    %v182 = vstv %s178
    %v183 = vadd.f32 %v182, %v181
    %s184 = sld [smem:[#allocation3 + $0x101]]
    %v185 = vstv %s184
    %v186 = vmul.f32 %v185, %v76
    %v187 = vadd.f32 %v183, %v186
    %s188 = sld [smem:[#allocation3 + $0x102]]
    %v189 = vstv %s188
    %v190 = vmul.f32 %v189, %v77
    %v191 = vadd.f32 %v187, %v190
    %s192 = sld [smem:[#allocation3 + $0x103]]
    %v193 = vstv %s192
    %v194 = vmul.f32 %v193, %v78
    %v195 = vadd.f32 %v191, %v194
    %s196 = sld [smem:[#allocation3 + $0x104]]
    %v197 = vstv %s196
    %v198 = vmul.f32 %v197, %v79
    %v199 = vadd.f32 %v195, %v198
    %s200 = sld [smem:[#allocation3 + $0x105]]
    %v201 = vstv %s200
    %v202 = vmul.f32 %v201, %v80
    %v203 = vadd.f32 %v199, %v202
    %s204 = sld [smem:[#allocation3 + $0x106]]
    %v205 = vstv %s204
    %v206 = vmul.f32 %v205, %v81
    %v207 = vadd.f32 %v203, %v206
    %s208 = sld [smem:[#allocation3 + $0x107]]
    %v209 = vstv %s208
    %v210 = vmul.f32 %v209, %v82
    %v211 = vadd.f32 %v207, %v210
    %s212 = sld [smem:[#allocation3 + $0x108]]
    %v213 = vstv %s212
    %v214 = vmul.f32 %v213, %v83
    %v215 = vadd.f32 %v211, %v214
    %s216 = sld [smem:[#allocation3 + $0x109]]
    %v217 = vstv %s216
    %v218 = vmul.f32 %v217, %v84
    %v219 = vadd.f32 %v215, %v218
    %v220 = vmax.f32 %v219, 0.0
    %s221 = sld [smem:[#allocation9 + $0x2]]
    %v222 = vstv %s221
    %v223 = vmul.f32 %v222, %v220
    %v224 = vadd.f32 %v177, %v223
    %s225 = sld [smem:[#allocation8 + $0x3]]
    %s226 = sld [smem:[#allocation3 + $0x180]]
    %v227 = vstv %s226
    %v228 = vmul.f32 %v227, %v75
    %v229 = vstv %s225
    %v230 = vadd.f32 %v229, %v228
    %s231 = sld [smem:[#allocation3 + $0x181]]
    %v232 = vstv %s231
    %v233 = vmul.f32 %v232, %v76
    %v234 = vadd.f32 %v230, %v233
    %s235 = sld [smem:[#allocation3 + $0x182]]
    %v236 = vstv %s235
    %v237 = vmul.f32 %v236, %v77
    %v238 = vadd.f32 %v234, %v237
    %s239 = sld [smem:[#allocation3 + $0x183]]
    %v240 = vstv %s239
    %v241 = vmul.f32 %v240, %v78
    %v242 = vadd.f32 %v238, %v241
    %s243 = sld [smem:[#allocation3 + $0x184]]
    %v244 = vstv %s243
    %v245 = vmul.f32 %v244, %v79
    %v246 = vadd.f32 %v242, %v245
    %s247 = sld [smem:[#allocation3 + $0x185]]
    %v248 = vstv %s247
    %v249 = vmul.f32 %v248, %v80
    %v250 = vadd.f32 %v246, %v249
    %s251 = sld [smem:[#allocation3 + $0x186]]
    %v252 = vstv %s251
    %v253 = vmul.f32 %v252, %v81
    %v254 = vadd.f32 %v250, %v253
    %s255 = sld [smem:[#allocation3 + $0x187]]
    %v256 = vstv %s255
    %v257 = vmul.f32 %v256, %v82
    %v258 = vadd.f32 %v254, %v257
    %s259 = sld [smem:[#allocation3 + $0x188]]
    %v260 = vstv %s259
    %v261 = vmul.f32 %v260, %v83
    %v262 = vadd.f32 %v258, %v261
    %s263 = sld [smem:[#allocation3 + $0x189]]
    %v264 = vstv %s263
    %v265 = vmul.f32 %v264, %v84
    %v266 = vadd.f32 %v262, %v265
    %v267 = vmax.f32 %v266, 0.0
    %s268 = sld [smem:[#allocation9 + $0x3]]
    %v269 = vstv %s268
    %v270 = vmul.f32 %v269, %v267
    %v271 = vadd.f32 %v224, %v270
    %s272 = sld [smem:[#allocation8 + $0x4]]
    %s273 = sld [smem:[#allocation3 + $0x200]]
    %v274 = vstv %s273
    %v275 = vmul.f32 %v274, %v75
    %v276 = vstv %s272
    %v277 = vadd.f32 %v276, %v275
    %s278 = sld [smem:[#allocation3 + $0x201]]
    %v279 = vstv %s278
    %v280 = vmul.f32 %v279, %v76
    %v281 = vadd.f32 %v277, %v280
    %s282 = sld [smem:[#allocation3 + $0x202]]
    %v283 = vstv %s282
    %v284 = vmul.f32 %v283, %v77
    %v285 = vadd.f32 %v281, %v284
    %s286 = sld [smem:[#allocation3 + $0x203]]
    %v287 = vstv %s286
    %v288 = vmul.f32 %v287, %v78
    %v289 = vadd.f32 %v285, %v288
    %s290 = sld [smem:[#allocation3 + $0x204]]
    %v291 = vstv %s290
    %v292 = vmul.f32 %v291, %v79
    %v293 = vadd.f32 %v289, %v292
    %s294 = sld [smem:[#allocation3 + $0x205]]
    %v295 = vstv %s294
    %v296 = vmul.f32 %v295, %v80
    %v297 = vadd.f32 %v293, %v296
    %s298 = sld [smem:[#allocation3 + $0x206]]
    %v299 = vstv %s298
    %v300 = vmul.f32 %v299, %v81
    %v301 = vadd.f32 %v297, %v300
    %s302 = sld [smem:[#allocation3 + $0x207]]
    %v303 = vstv %s302
    %v304 = vmul.f32 %v303, %v82
    %v305 = vadd.f32 %v301, %v304
    %s306 = sld [smem:[#allocation3 + $0x208]]
    %v307 = vstv %s306
    %v308 = vmul.f32 %v307, %v83
    %v309 = vadd.f32 %v305, %v308
    %s310 = sld [smem:[#allocation3 + $0x209]]
    %v311 = vstv %s310
    %v312 = vmul.f32 %v311, %v84
    %v313 = vadd.f32 %v309, %v312
    %v314 = vmax.f32 %v313, 0.0
    %s315 = sld [smem:[#allocation9 + $0x4]]
    %v316 = vstv %s315
    %v317 = vmul.f32 %v316, %v314
    %v318 = vadd.f32 %v271, %v317
    %s319 = sld [smem:[#allocation2]]
    %v320 = vstv %s319
    %v321 = vadd.f32 %v318, %v320
    %322 = vst [vmem:[#allocation12] sm:$0xff] %v321
    // Predicated region
    $region38: #{tpu_custom_call.1} parent=1 // pred_check
      _
    $region39: #{tpu_custom_call.1} parent=1 // pred_check_branch
      %324 = sbr.rel (0) target = $region41
    $region40: #{tpu_custom_call.1} parent=1 // pred_region
      %326 = vsyncadd [#allocation5], 0
      %s328 = sshll.u32 [#allocation12], 4
      %s329 = int_to_ptr.vmem [resolvable:$true] %s328
      %s330 = sshll.u32 %s5, 4
      %s331 = int_to_ptr.hbm [resolvable:$true] %s330
      %333 = dma.vmem_to_hbm [thread:$0]  %s329, 128, %s331, [#allocation5]
    $region41: #{tpu_custom_call.1} parent=1 // pred_fallthru
      _
    // Predicated region
    $region42: #{tpu_custom_call.1} parent=1 // pred_check
      _
    $region43: #{tpu_custom_call.1} parent=1 // pred_check_branch
      %335 = sbr.rel (0) target = $region45
    $region44: #{tpu_custom_call.1} parent=1 // pred_region
      %337 = dma.done [#allocation5], 128
    $region45: #{tpu_custom_call.1} parent=1 // pred_fallthru
      _
    %338 = vsyncpa [#allocation4], 1
    %339 = vsyncpa [#allocation5], 1
    %340 = vsyncpa [#allocation6], 1
    %341 = vsyncpa [#allocation7], 1
    %342 = vsyncpa [#allocation10], 1

</llo_original>
